<compile_context>
chip_gen: v6e
topology: v6e:2x2x1
jax: 0.10.0
libtpu: 0.0.40
codegen_flags: <defaults>
</compile_context>

<pallas_src>
import math

import jax
import jax.numpy as jnp
from jax.experimental import pallas as pl
from jax.experimental.pallas import tpu as pltpu


def _round_up(x, m):
    return ((x + m - 1) // m) * m


def _sublane(dtype):
    # Second-to-last block-dim granularity: 8 for 4-byte, 16 for 2-byte,
    # 32 for 1-byte dtypes.
    itemsize = jnp.dtype(dtype).itemsize
    return max(8, 32 // itemsize)


def _pick_tile(dim, gran, cap):
    """Tile size: a multiple of `gran`, <= cap, minimizing padding waste.

    Tie-break prefers 256-aligned tiles (v6e/v7x MXU is 2x256x256) and then
    larger tiles (fewer ~0.35us grid steps, better HBM reuse).
    """
    dim_r = _round_up(dim, gran)
    cap = max(cap, gran)
    if dim_r <= cap:
        return dim_r
    best_key, best_t = None, gran
    t = (cap // gran) * gran
    while t >= gran:
        waste = _round_up(dim_r, t) - dim_r
        key = (waste, 0 if t % 256 == 0 else 1, -t)
        if best_key is None or key < best_key:
            best_key, best_t = key, t
        if waste == 0 and t % 256 == 0:
            break
        t -= gran
    return best_t


# ---------------------------------------------------------------------------
# Kernel bodies
# ---------------------------------------------------------------------------

def _kernel_bias_acc(x_ref, w_ref, b_ref, o_ref, acc_ref):
    # x:(tm,tk)  w:(tk,tn)  b:(1,tn) f32  o:(tm,tn)  acc:(tm,tn) f32
    k = pl.program_id(2)

    @pl.when(k == 0)
    def _():
        # Bias folded into accumulator init (no epilogue add).
        acc_ref[...] = jnp.broadcast_to(b_ref[...], acc_ref.shape)

    acc_ref[...] += jnp.dot(x_ref[...], w_ref[...],
                            preferred_element_type=jnp.float32)

    @pl.when(k == pl.num_programs(2) - 1)
    def _():
        o_ref[...] = acc_ref[...].astype(o_ref.dtype)


def _kernel_nobias_acc(x_ref, w_ref, o_ref, acc_ref):
    k = pl.program_id(2)

    @pl.when(k == 0)
    def _():
        acc_ref[...] = jnp.zeros_like(acc_ref)

    acc_ref[...] += jnp.dot(x_ref[...], w_ref[...],
                            preferred_element_type=jnp.float32)

    @pl.when(k == pl.num_programs(2) - 1)
    def _():
        o_ref[...] = acc_ref[...].astype(o_ref.dtype)


def _kernel_bias_inplace(x_ref, w_ref, b_ref, o_ref):
    # Output dtype is f32: accumulate directly into the resident output block.
    k = pl.program_id(2)

    @pl.when(k == 0)
    def _():
        o_ref[...] = jnp.broadcast_to(b_ref[...], o_ref.shape)

    o_ref[...] += jnp.dot(x_ref[...], w_ref[...],
                          preferred_element_type=jnp.float32)


def _kernel_nobias_inplace(x_ref, w_ref, o_ref):
    k = pl.program_id(2)

    @pl.when(k == 0)
    def _():
        o_ref[...] = jnp.zeros_like(o_ref)

    o_ref[...] += jnp.dot(x_ref[...], w_ref[...],
                          preferred_element_type=jnp.float32)


# ---------------------------------------------------------------------------
# Module wrapper (weight prepared once, forward = hot path only)
# ---------------------------------------------------------------------------

class QLinearPallas:
    """Pallas TPU equivalent of QLinearLayer.forward: y = F.linear(x, W, b)."""

    def __init__(self, weight, bias=None, *, compute_dtype=None,
                 tm_max=512, tn_max=512, tk_max=1024):
        weight = jnp.asarray(weight)
        out_features, in_features = weight.shape
        self.out_features = out_features
        self.in_features = in_features
        self.tm_max = tm_max

        # Pin the MXU compute dtype explicitly (deterministic across chips).
        self.compute_dtype = (jnp.dtype(compute_dtype)
                              if compute_dtype is not None
                              else jnp.dtype(weight.dtype))

        # Static (K, N) tile picks — 128-lane granularity, 256-preferred.
        self.tn = _pick_tile(out_features, 128, tn_max)
        self.tk = _pick_tile(in_features, 128, tk_max)
        self.np_ = _round_up(out_features, self.tn)
        self.kp = _round_up(in_features, self.tk)

        # One-time transpose + cast + pad of the weight -> (Kp, Np).
        w_t = weight.T.astype(self.compute_dtype)
        if (self.kp, self.np_) != (in_features, out_features):
            w_t = jnp.pad(w_t, ((0, self.kp - in_features),
                                (0, self.np_ - out_features)))
        self.w_t = w_t

        if bias is not None:
            b = jnp.asarray(bias).astype(jnp.float32).reshape(1, out_features)
            if self.np_ != out_features:
                b = jnp.pad(b, ((0, 0), (0, self.np_ - out_features)))
            self.bias = b
        else:
            self.bias = None

    def __call__(self, x):
        out_dtype = jnp.dtype(x.dtype)
        lead_shape = x.shape[:-1]
        m = math.prod(lead_shape) if lead_shape else 1

        x2d = x.reshape(m, self.in_features).astype(self.compute_dtype)

        # tm granularity must satisfy BOTH the compute-dtype tile (x block)
        # and the output-dtype tile (out block).
        sub = max(_sublane(self.compute_dtype), _sublane(out_dtype))
        tm = _pick_tile(m, sub, self.tm_max)
        mp = _round_up(m, tm)

        tn, tk = self.tn, self.tk
        grid_m = mp // tm
        grid_n = self.np_ // tn
        # v7x has 2 TensorCores: ensure a "parallel" axis has >=2 tiles when
        # possible (free on single-TC v5e/v6e).
        if grid_m == 1 and grid_n == 1 and tn >= 256 and (tn // 2) % 128 == 0:
            tn = tn // 2
            grid_n = self.np_ // tn

        if (mp, self.kp) != (m, self.in_features):
            x2d = jnp.pad(x2d, ((0, mp - m), (0, self.kp - self.in_features)))

        grid = (grid_m, grid_n, self.kp // tk)

        x_spec = pl.BlockSpec((tm, tk), lambda i, j, k: (i, k))
        w_spec = pl.BlockSpec((tk, tn), lambda i, j, k: (k, j))
        out_spec = pl.BlockSpec((tm, tn), lambda i, j, k: (i, j))

        # f32 output: accumulate directly into the resident output block.
        inplace = out_dtype == jnp.dtype(jnp.float32)

        cd_b = jnp.dtype(self.compute_dtype).itemsize
        out_b = out_dtype.itemsize
        vmem_est = (2 * (tm * tk * cd_b + tk * tn * cd_b)   # double-buffered x, w
                    + 2 * tm * tn * out_b                    # double-buffered out
                    + (0 if inplace else tm * tn * 4)        # f32 accumulator
                    + 2 * tn * 4)                            # bias
        # Budget against v7x's 64 MiB physical VMEM; v5e's scoped default is
        # only 16 MiB so always set the limit explicitly.
        vmem_limit = int(min(48 * 2**20, max(vmem_est + (4 << 20), 32 * 2**20)))

        compiler_params = pltpu.CompilerParams(
            dimension_semantics=("parallel", "parallel", "arbitrary"),
            vmem_limit_bytes=vmem_limit,
        )
        cost = pl.CostEstimate(
            flops=2 * mp * self.np_ * self.kp,
            transcendentals=0,
            bytes_accessed=(mp * self.kp * cd_b
                            + self.kp * self.np_ * cd_b
                            + mp * self.np_ * out_b),
        )

        if self.bias is None:
            in_specs = [x_spec, w_spec]
            args = (x2d, self.w_t)
            kernel = _kernel_nobias_inplace if inplace else _kernel_nobias_acc
        else:
            b_spec = pl.BlockSpec((1, tn), lambda i, j, k: (0, j))
            in_specs = [x_spec, w_spec, b_spec]
            args = (x2d, self.w_t, self.bias)
            kernel = _kernel_bias_inplace if inplace else _kernel_bias_acc

        scratch_shapes = [] if inplace else [pltpu.VMEM((tm, tn), jnp.float32)]

        grid_spec = pltpu.PrefetchScalarGridSpec(
            num_scalar_prefetch=0,
            grid=grid,
            in_specs=in_specs,
            out_specs=out_spec,
            scratch_shapes=scratch_shapes,
        )
        out2d = pl.pallas_call(
            kernel,
            out_shape=jax.ShapeDtypeStruct((mp, self.np_), out_dtype),
            grid_spec=grid_spec,
            compiler_params=compiler_params,
            cost_estimate=cost,
        )(*args)

        if (mp, self.np_) != (m, self.out_features):
            out2d = out2d[:m, :self.out_features]
        return out2d.reshape(*lead_shape, self.out_features)


def qlinear_forward(x, weight, bias=None, **kwargs):
    """Functional convenience wrapper (prepares weight on every call)."""
    return QLinearPallas(weight, bias, **kwargs)(x)


if __name__ == "__main__":
    key = jax.random.PRNGKey(0)
    kx, kw, kb = jax.random.split(key, 3)

    batch, seq, in_features, out_features = 2, 8, 32, 64

    x = jax.random.normal(kx, (batch, seq, in_features), dtype=jnp.float32)
    weight = jax.random.normal(kw, (out_features, in_features),
                               dtype=jnp.float32) * 0.05
    bias = jax.random.normal(kb, (out_features,), dtype=jnp.float32) * 0.05

    # --- float32, with bias (in-place f32 accumulation path) ---
    layer = QLinearPallas(weight, bias)
    y = jax.block_until_ready(layer(x))
    y_ref = x @ weight.T + bias
    assert y.shape == (batch, seq, out_features)
    assert jnp.allclose(y, y_ref, atol=1e-5, rtol=1e-5)

    # --- float32, no bias ---
    layer_nb = QLinearPallas(weight, None)
    y_nb = jax.block_until_ready(layer_nb(x))
    assert jnp.allclose(y_nb, x @ weight.T, atol=1e-5, rtol=1e-5)

    # --- bfloat16 compute/output (f32 VMEM scratch accumulator path) ---
    x_bf = x.astype(jnp.bfloat16)
    layer_bf = QLinearPallas(weight.astype(jnp.bfloat16),
                             bias.astype(jnp.bfloat16))
    y_bf = jax.block_until_ready(layer_bf(x_bf))
    y_bf_ref = (x_bf.astype(jnp.float32) @ weight.T + bias)
    assert y_bf.dtype == jnp.bfloat16
    assert jnp.allclose(y_bf.astype(jnp.float32), y_bf_ref, atol=5e-2, rtol=5e-2)

    print("KERNEL_OK")
</pallas_src>

<mosaic_0001>
module attributes {stable_mosaic.version = 11 : i64} {
  func.func @_kernel_bias_inplace(%arg0: i32, %arg1: i32, %arg2: i32, %arg3: memref<16x128xf32, #tpu.memory_space<vmem>>, %arg4: memref<128x128xf32, #tpu.memory_space<vmem>>, %arg5: memref<1x128xf32, #tpu.memory_space<vmem>>, %arg6: memref<16x128xf32, #tpu.memory_space<vmem>>) attributes {dimension_semantics = [#tpu.dimension_semantics<parallel>, #tpu.dimension_semantics<parallel>, #tpu.dimension_semantics<arbitrary>], iteration_bounds = array<i64: 1, 1, 1>, scalar_prefetch = 0 : i64, scratch_operands = 0 : i64, tpu.core_type = #tpu.core_type<tc>, window_params = [{transform_indices = @transform_0, window_bounds = array<i64: 16, 128>}, {transform_indices = @transform_1, window_bounds = array<i64: 128, 128>}, {transform_indices = @transform_2, window_bounds = array<i64: 1, 128>}, {transform_indices = @transform_3, window_bounds = array<i64: 16, 128>}]} {
    %c0_i32 = arith.constant 0 : i32
    %0 = arith.cmpi eq, %arg2, %c0_i32 : i32
    %1 = arith.extui %0 : i1 to i32
    %c0_i32_0 = arith.constant 0 : i32
    %2 = arith.cmpi ne, %1, %c0_i32_0 : i32
    scf.if %2 {
      %c0_8 = arith.constant 0 : index
      %c0_9 = arith.constant 0 : index
      %9 = vector.load %arg5[%c0_8, %c0_9] : memref<1x128xf32, #tpu.memory_space<vmem>>, vector<1x128xf32>
      %10 = vector.shape_cast %9 : vector<1x128xf32> to vector<1x128xf32>
      %11 = vector.broadcast %10 : vector<1x128xf32> to vector<16x128xf32>
      %c0_10 = arith.constant 0 : index
      %c0_11 = arith.constant 0 : index
      %12 = vector.load %arg6[%c0_10, %c0_11] : memref<16x128xf32, #tpu.memory_space<vmem>>, vector<16x128xf32>
      tpu.vector_store %arg6[%c0_10, %c0_11], %11 {strides = array<i32>} : memref<16x128xf32, #tpu.memory_space<vmem>>, vector<16x128xf32>,
    } else {
    }
    %c0 = arith.constant 0 : index
    %c0_1 = arith.constant 0 : index
    %3 = vector.load %arg6[%c0, %c0_1] : memref<16x128xf32, #tpu.memory_space<vmem>>, vector<16x128xf32>
    %c0_2 = arith.constant 0 : index
    %c0_3 = arith.constant 0 : index
    %4 = vector.load %arg3[%c0_2, %c0_3] : memref<16x128xf32, #tpu.memory_space<vmem>>, vector<16x128xf32>
    %c0_4 = arith.constant 0 : index
    %c0_5 = arith.constant 0 : index
    %5 = vector.load %arg4[%c0_4, %c0_5] : memref<128x128xf32, #tpu.memory_space<vmem>>, vector<128x128xf32>
    %cst = arith.constant dense<0.000000e+00> : vector<16x128xf32>
    %6 = tpu.matmul %4, %5, %cst {dimension_numbers = #tpu.dot_dimension_numbers<[1], [0], [0], [1], [0, 0, 1, 1], [], []>} : vector<16x128xf32>, vector<128x128xf32>, vector<16x128xf32> -> vector<16x128xf32>
    %7 = arith.addf %3, %6 : vector<16x128xf32>
    %c0_6 = arith.constant 0 : index
    %c0_7 = arith.constant 0 : index
    %8 = vector.load %arg6[%c0_6, %c0_7] : memref<16x128xf32, #tpu.memory_space<vmem>>, vector<16x128xf32>
    tpu.vector_store %arg6[%c0_6, %c0_7], %7 {strides = array<i32>} : memref<16x128xf32, #tpu.memory_space<vmem>>, vector<16x128xf32>,
    return
  }
  func.func @transform_0(%arg0: i32, %arg1: i32, %arg2: i32) -> (i32, i32) {
    %c0_i32 = arith.constant 0 : i32
    return %arg0, %arg2 : i32, i32
  }
  func.func @transform_1(%arg0: i32, %arg1: i32, %arg2: i32) -> (i32, i32) {
    %c0_i32 = arith.constant 0 : i32
    return %arg2, %arg1 : i32, i32
  }
  func.func @transform_2(%arg0: i32, %arg1: i32, %arg2: i32) -> (i32, i32) {
    %c0_i32 = arith.constant 0 : i32
    %c0_i32_0 = arith.constant 0 : i32
    return %c0_i32, %arg1 : i32, i32
  }
  func.func @transform_3(%arg0: i32, %arg1: i32, %arg2: i32) -> (i32, i32) {
    %c0_i32 = arith.constant 0 : i32
    return %arg0, %arg1 : i32, i32
  }
}

</mosaic_0001>

<llo_original>
// kernel: tpu_custom_call.1
$region0: #{tpu_custom_call.1}
  #allocation0 [shape = 'u32[]', space=smem, size = 0x4, offset = 0x4, fixed_abs, tag = 'smem constant byte address 0x4 - core index']
  #allocation1 [shape = 'u32[144,128]{1,0:T(1,128)}', space=vmem, size = 0x12000, scoped, tag = 'internal scratch']
  %s0 = inlined_call_operand.hbm [shape: f32[16,128], index: 0, kind: input, shape index: {}]
  %s1 = inlined_call_operand.hbm [shape: f32[128,128], index: 1, kind: input, shape index: {}]
  %s2 = inlined_call_operand.vmem [shape: f32[1,128], index: 2, kind: input, shape index: {}]
  %s3 = inlined_call_operand.hbm [shape: f32[16,128], index: 3, kind: output, shape index: {}]
  %s4 = sld [smem:[#allocation0]]
  $region34: #{tpu_custom_call.1} parent=0
    _
  %s6 = ssub.s32 1, %s4
  %s7 = scalar_select 0, %s6, %s4
  $region1: #{tpu_custom_call.1} parent=0
    #allocation2 [shape = 'u8[8192]{0}', space=vmem, size = 0x2000, scoped, tag = 'input window, operand 0, single buffered']
    #allocation3 [shape = 's32[1]{0}', space=sflag, size = 0x4, scoped, tag = 'scoped memory for tpu_custom_call.1']
    #allocation4 [shape = 's32[1]{0}', space=sflag, size = 0x4, scoped, tag = 'scoped memory for tpu_custom_call.1']
    #allocation5 [shape = 'u8[65536]{0}', space=vmem, size = 0x10000, scoped, tag = 'input window, operand 1, single buffered']
    #allocation6 [shape = 's32[1]{0}', space=sflag, size = 0x4, scoped, tag = 'scoped memory for tpu_custom_call.1']
    #allocation7 [shape = 'u8[8192]{0}', space=vmem, size = 0x2000, scoped, tag = 'output window, operand 0, single buffered']
    %8 = vsyncpa [#allocation3], 0
    %9 = vsyncpa [#allocation6], 0
    %10 = vsyncpa [#allocation4], 0
    // Predicated region
    $region2: #{tpu_custom_call.1} parent=1 // pred_check
      _
    $region3: #{tpu_custom_call.1} parent=1 // pred_check_branch
      %12 = sbr.rel (0) target = $region5
    $region4: #{tpu_custom_call.1} parent=1 // pred_region
      %s14 = ssub.s32 256, 256
      %15 = vsyncadd [#allocation3], %s14
      %s16 = sshll.u32 [#allocation2], 4
      %s17 = int_to_ptr.vmem [resolvable:$true] %s16
      %22 = dma.hbm_to_vmem [thread:$0]  %s0, 256, %s17, [#allocation3], 128, 128, 8
    $region5: #{tpu_custom_call.1} parent=1 // pred_fallthru
      _
    // Predicated region
    $region6: #{tpu_custom_call.1} parent=1 // pred_check
      _
    $region7: #{tpu_custom_call.1} parent=1 // pred_check_branch
      %24 = sbr.rel (0) target = $region9
    $region8: #{tpu_custom_call.1} parent=1 // pred_region
      %s26 = ssub.s32 2048, 2048
      %27 = vsyncadd [#allocation6], %s26
      %s28 = sshll.u32 [#allocation5], 4
      %s29 = int_to_ptr.vmem [resolvable:$true] %s28
      %34 = dma.hbm_to_vmem [thread:$0]  %s1, 2048, %s29, [#allocation6], 128, 128, 8
    $region9: #{tpu_custom_call.1} parent=1 // pred_fallthru
      _
    // Predicated region
    $region10: #{tpu_custom_call.1} parent=1 // pred_check
      _
    $region11: #{tpu_custom_call.1} parent=1 // pred_check_branch
      %36 = sbr.rel (0) target = $region13
    $region12: #{tpu_custom_call.1} parent=1 // pred_region
      _
    $region13: #{tpu_custom_call.1} parent=1 // pred_fallthru
      _
    // Predicated region
    $region14: #{tpu_custom_call.1} parent=1 // pred_check
      _
    $region15: #{tpu_custom_call.1} parent=1 // pred_check_branch
      %38 = sbr.rel (0) target = $region17
    $region16: #{tpu_custom_call.1} parent=1 // pred_region
      %39 = dma.done [#allocation3], 256
    $region17: #{tpu_custom_call.1} parent=1 // pred_fallthru
      _
    // Predicated region
    $region18: #{tpu_custom_call.1} parent=1 // pred_check
      _
    $region19: #{tpu_custom_call.1} parent=1 // pred_check_branch
      %41 = sbr.rel (0) target = $region21
    $region20: #{tpu_custom_call.1} parent=1 // pred_region
      %42 = dma.done [#allocation6], 2048
    $region21: #{tpu_custom_call.1} parent=1 // pred_fallthru
      _
    %p43 = scmp.eq.s32.totalorder 0, 0
    // Predicated region
    $region22: #{tpu_custom_call.1} parent=1 // pred_check
      %p44 = pneg %p43
    $region23: #{tpu_custom_call.1} parent=1 // pred_check_branch
      %46 = sbr.rel (%p44) target = $region25
    $region24: #{tpu_custom_call.1} parent=1 // pred_region
      %v47 = vld [vmem:[%s2] sm:$0x1]
      %v49 = vlaneseq
      %v50 = vshrl.u32 %v49, 7
      %v51 = vsub.s32 0, %v50
      %v52 = vrot.slane %v47, %v51
      %54 = vst [vmem:[#allocation7] sm:$0xff] %v52
      %55 = vst [vmem:[#allocation7 + $0x8] sm:$0xff] %v52
    $region25: #{tpu_custom_call.1} parent=1 // pred_fallthru
      _
    %v56 = vld [vmem:[#allocation7] sm:$0xff]
    %v57 = vld [vmem:[#allocation7 + $0x8] sm:$0xff]
    %v58 = vld [vmem:[#allocation2] sm:$0xff]
    %v59 = vld [vmem:[#allocation2 + $0x8] sm:$0xff]
    %v60 = vld [vmem:[#allocation5] sm:$0xff]
    %v61 = vld [vmem:[#allocation5 + $0x8] sm:$0xff]
    %v62 = vld [vmem:[#allocation5 + $0x10] sm:$0xff]
    %v63 = vld [vmem:[#allocation5 + $0x18] sm:$0xff]
    %v64 = vld [vmem:[#allocation5 + $0x20] sm:$0xff]
    %v65 = vld [vmem:[#allocation5 + $0x28] sm:$0xff]
    %v66 = vld [vmem:[#allocation5 + $0x30] sm:$0xff]
    %v67 = vld [vmem:[#allocation5 + $0x38] sm:$0xff]
    %v68 = vld [vmem:[#allocation5 + $0x40] sm:$0xff]
    %v69 = vld [vmem:[#allocation5 + $0x48] sm:$0xff]
    %v70 = vld [vmem:[#allocation5 + $0x50] sm:$0xff]
    %v71 = vld [vmem:[#allocation5 + $0x58] sm:$0xff]
    %v72 = vld [vmem:[#allocation5 + $0x60] sm:$0xff]
    %v73 = vld [vmem:[#allocation5 + $0x68] sm:$0xff]
    %v74 = vld [vmem:[#allocation5 + $0x70] sm:$0xff]
    %v75 = vld [vmem:[#allocation5 + $0x78] sm:$0xff]
    %76 = vmatprep.subr.mxu0 0.0
    %77 = vmatpush1.msra.mxu0 %v75
    %78 = vmatprep.subr.mxu0 0.0
    %79 = vmatpush1.msra.mxu0 %v74
    %80 = vmatprep.subr.mxu0 0.0
    %81 = vmatpush1.msra.mxu0 %v73
    %82 = vmatprep.subr.mxu0 0.0
    %83 = vmatpush1.msra.mxu0 %v72
    %84 = vmatprep.subr.mxu0 0.0
    %85 = vmatpush1.msra.mxu0 %v71
    %86 = vmatprep.subr.mxu0 0.0
    %87 = vmatpush1.msra.mxu0 %v70
    %88 = vmatprep.subr.mxu0 0.0
    %89 = vmatpush1.msra.mxu0 %v69
    %90 = vmatprep.subr.mxu0 0.0
    %91 = vmatpush1.msra.mxu0 %v68
    %92 = vmatprep.subr.mxu0 0.0
    %93 = vmatpush1.msra.mxu0 %v67
    %94 = vmatprep.subr.mxu0 0.0
    %95 = vmatpush1.msra.mxu0 %v66
    %96 = vmatprep.subr.mxu0 0.0
    %97 = vmatpush1.msra.mxu0 %v65
    %98 = vmatprep.subr.mxu0 0.0
    %99 = vmatpush1.msra.mxu0 %v64
    %100 = vmatprep.subr.mxu0 0.0
    %101 = vmatpush1.msra.mxu0 %v63
    %102 = vmatprep.subr.mxu0 0.0
    %103 = vmatpush1.msra.mxu0 %v62
    %104 = vmatprep.subr.mxu0 0.0
    %105 = vmatpush1.msra.mxu0 %v61
    %106 = vmatprep.subr.mxu0 0.0
    %107 = vmatpush1.msra.mxu0 %v60
    %108 = vmatprep.subr.mxu0 0.0
    %109 = vmatpush2.msra.mxu0 0.0
    %110 = vmatprep.subr.mxu0 0.0
    %111 = vmatpush2.msra.mxu0 0.0
    %112 = vmatprep.subr.mxu0 0.0
    %113 = vmatpush2.msra.mxu0 0.0
    %114 = vmatprep.subr.mxu0 0.0
    %115 = vmatpush2.msra.mxu0 0.0
    %116 = vmatprep.subr.mxu0 0.0
    %117 = vmatpush2.msra.mxu0 0.0
    %118 = vmatprep.subr.mxu0 0.0
    %119 = vmatpush2.msra.mxu0 0.0
    %120 = vmatprep.subr.mxu0 0.0
    %121 = vmatpush2.msra.mxu0 0.0
    %122 = vmatprep.subr.mxu0 0.0
    %123 = vmatpush2.msra.mxu0 0.0
    %124 = vmatprep.subr.mxu0 0.0
    %125 = vmatpush2.msra.mxu0 0.0
    %126 = vmatprep.subr.mxu0 0.0
    %127 = vmatpush2.msra.mxu0 0.0
    %128 = vmatprep.subr.mxu0 0.0
    %129 = vmatpush2.msra.mxu0 0.0
    %130 = vmatprep.subr.mxu0 0.0
    %131 = vmatpush2.msra.mxu0 0.0
    %132 = vmatprep.subr.mxu0 0.0
    %133 = vmatpush2.msra.mxu0 0.0
    %134 = vmatprep.subr.mxu0 0.0
    %135 = vmatpush2.msra.mxu0 0.0
    %136 = vmatprep.subr.mxu0 0.0
    %137 = vmatpush2.msra.mxu0 0.0
    %138 = vmatprep.subr.mxu0 0.0
    %139 = vmatpush2.msra.mxu0 0.0
    %140 = vmatprep.mubr.f32.mxu0 0.0
    %141 = vmatmul.mubr.f32.gmra.mxu0 %v58
    %v142 = vpop.f32.mrf.mxu0
    %v143 = vadd.f32 0.0, %v142
    %v144 = vpop.f32.mrf.mxu0
    %145 = vmatprep.mubr.f32.mxu0 0.0
    %146 = vmatmul.mubr.f32.gmra.mxu0 %v59
    %v147 = vpop.f32.mrf.mxu0
    %v148 = vadd.f32 0.0, %v147
    %v149 = vpop.f32.mrf.mxu0
    %150 = vdwg.mxu0
    %v151 = vadd.f32 %v56, %v143
    %v152 = vadd.f32 %v57, %v148
    %153 = vst [vmem:[#allocation7] sm:$0xff] %v151
    %154 = vst [vmem:[#allocation7 + $0x8] sm:$0xff] %v152
    // Predicated region
    $region26: #{tpu_custom_call.1} parent=1 // pred_check
      _
    $region27: #{tpu_custom_call.1} parent=1 // pred_check_branch
      %156 = sbr.rel (0) target = $region29
    $region28: #{tpu_custom_call.1} parent=1 // pred_region
      %s158 = ssub.s32 256, 256
      %159 = vsyncadd [#allocation4], %s158
      %s160 = sshll.u32 [#allocation7], 4
      %s161 = int_to_ptr.vmem [resolvable:$true] %s160
      %166 = dma.vmem_to_hbm [thread:$0]  %s161, 256, %s3, [#allocation4], 128, 128, 8
    $region29: #{tpu_custom_call.1} parent=1 // pred_fallthru
      _
    // Predicated region
    $region30: #{tpu_custom_call.1} parent=1 // pred_check
      _
    $region31: #{tpu_custom_call.1} parent=1 // pred_check_branch
      %168 = sbr.rel (0) target = $region33
    $region32: #{tpu_custom_call.1} parent=1 // pred_region
      %169 = dma.done [#allocation4], 256
    $region33: #{tpu_custom_call.1} parent=1 // pred_fallthru
      _
    %170 = vsyncpa [#allocation3], 1
    %171 = vsyncpa [#allocation6], 1
    %172 = vsyncpa [#allocation4], 1

</llo_original>
